<compile_context>
chip_gen: v7x
topology: tpu7x:2x2x1
jax: 0.10.0
libtpu: 0.0.40
codegen_flags: <defaults>
</compile_context>

<pallas_src>
import jax
import jax.numpy as jnp
from jax.experimental import pallas as pl
from jax.experimental.pallas import tpu as pltpu


def dsntli_kernel(x_ref, w_ref, out_ref):
    # x_ref:   (Bt, T*HW)   batch tile of flattened heatmap sequences
    # w_ref:   (T*HW, Nout) fused DSNT + leaky-integrator weights (lane-padded)
    # out_ref: (Bt, Nout)   lane-dense output tile, single unmasked store
    out_ref[...] = jnp.dot(
        x_ref[...], w_ref[...], preferred_element_type=jnp.float32
    )


def _round_up(x, m):
    return ((x + m - 1) // m) * m


def make_probs(resolution):
    H, W = resolution
    lin_x = jnp.linspace(-1.0, 1.0, W)
    lin_y = jnp.linspace(-1.0, 1.0, H)
    probs_x = jnp.tile(lin_x, H)      # varies with column, shape (H*W,)
    probs_y = jnp.repeat(lin_y, W)    # varies with row,    shape (H*W,)
    return probs_x, probs_y


def _build_weight(li_tm, resolution, T, n_out):
    """Fused constant weight matrix, shape (T*HW, n_out).

    Column j = t*2 + c (c=0 -> y / co_2, c=1 -> x / co_1) matches
    torch.stack((co_2, co_1), -1); columns >= 2*T are zero padding.
    """
    H, Wd = resolution
    HW = H * Wd
    probs_x, probs_y = make_probs(resolution)
    probs = jnp.stack([probs_y, probs_x], axis=1).astype(jnp.float32)   # (HW, 2)

    decay = (1.0 - li_tm.astype(jnp.float32)).reshape(1, 1, 2)          # (1,1,2)
    t_idx = jnp.arange(T).reshape(T, 1, 1)
    s_idx = jnp.arange(T).reshape(1, T, 1)
    expo = jnp.maximum(t_idx - s_idx, 0)
    L = jnp.where(s_idx <= t_idx, decay ** expo, 0.0)                   # (T,T,2)

    # rows: s*HW + p ; cols: t*2 + c
    W_full = jnp.einsum("tsc,pc->sptc", L, probs).reshape(T * HW, T * 2)
    return jnp.pad(W_full, ((0, 0), (0, n_out - T * 2)))


def dsntli_forward(x, li_tm, resolution, state=None):
    """Matches DSNTLI.forward. Accepts x of shape (T, H, W) (original module
    signature) or (B, T, H, W) (batched sequences, one forward per batch row).
    Returns (out, final_state)."""
    squeeze = x.ndim == 3
    if squeeze:
        x = x[None]
    B, T, H, Wd = x.shape
    assert (H, Wd) == tuple(resolution)
    HW = H * Wd
    K = T * HW
    n_out = max(128, _round_up(2 * T, 128))

    # Batch tiling: sublane-aligned tiles, up to 128 rows per grid step.
    bt = min(128, _round_up(B, 8))
    B_pad = _round_up(B, bt)

    x_flat = x.reshape(B, K).astype(jnp.float32)
    if B_pad != B:
        x_flat = jnp.pad(x_flat, ((0, B_pad - B), (0, 0)))

    W = _build_weight(li_tm, resolution, T, n_out)                      # (K, n_out)

    out_pad = pl.pallas_call(
        dsntli_kernel,
        out_shape=jax.ShapeDtypeStruct((B_pad, n_out), jnp.float32),
        grid=(B_pad // bt,),
        in_specs=[
            pl.BlockSpec((bt, K), lambda i: (i, 0)),       # batch tile of x
            pl.BlockSpec((K, n_out), lambda i: (0, 0)),    # fused weights (resident)
        ],
        out_specs=pl.BlockSpec((bt, n_out), lambda i: (i, 0)),
        compiler_params=pltpu.CompilerParams(
            dimension_semantics=("parallel",)
        ),
    )(x_flat, W)

    out = out_pad[:B, : 2 * T].reshape(B, T, 2)

    if state is not None:
        # Optional nonzero initial state: state_t += decay^(t+1) * state_0.
        # Tiny O(B*T*2) correction applied outside the kernel.
        decay = (1.0 - li_tm.astype(jnp.float32)).reshape(1, 1, 2)
        pows = decay ** jnp.arange(1, T + 1, dtype=jnp.float32).reshape(1, T, 1)
        out = out + jnp.asarray(state, jnp.float32).reshape(-1, 1, 2) * pows

    final_state = out[:, -1, :]
    if squeeze:
        return out[0], final_state[0]
    return out, final_state


def dsntli_reference(x, li_tm, resolution, state=None):
    """Pure-JAX reference mirroring the PyTorch forward (sequential recurrence)."""
    H, Wd = resolution
    T = x.shape[-3]
    probs_x, probs_y = make_probs(resolution)
    xf = x.reshape(*x.shape[:-2], H * Wd)
    co_1 = (xf * probs_x).sum(-1)
    co_2 = (xf * probs_y).sum(-1)
    cos = jnp.stack([co_2, co_1], axis=-1)                  # (..., T, 2)
    if state is None:
        state = jnp.zeros(cos.shape[:-2] + (2,), jnp.float32)
    outs = []
    for t in range(T):
        state = state - state * li_tm + cos[..., t, :]
        outs.append(state)
    return jnp.stack(outs, axis=-2), state


if __name__ == "__main__":
    resolution = (16, 16)
    T, B = 8, 16
    key = jax.random.PRNGKey(0)
    x = jax.random.normal(key, (B, T, *resolution), dtype=jnp.float32)

    # Deterministic parameter init per module __init__: li_tm = [0.9, 0.9]
    li_tm = jnp.array([0.9, 0.9], dtype=jnp.float32)

    # Batched forward (one DSNTLI forward per batch row).
    out, state = dsntli_forward(x, li_tm, resolution)
    out = jax.block_until_ready(out)
    state = jax.block_until_ready(state)

    ref_out, ref_state = dsntli_reference(x, li_tm, resolution)
    assert out.shape == (B, T, 2) and state.shape == (B, 2)
    assert jnp.allclose(out, ref_out, atol=2e-4, rtol=2e-4)
    assert jnp.allclose(state, ref_state, atol=2e-4, rtol=2e-4)

    # Unbatched path matching the original module signature exactly.
    out1, state1 = dsntli_forward(x[0], li_tm, resolution)
    out1 = jax.block_until_ready(out1)
    ref_out1, ref_state1 = dsntli_reference(x[0], li_tm, resolution)
    assert out1.shape == (T, 2) and state1.shape == (2,)
    assert jnp.allclose(out1, ref_out1, atol=2e-4, rtol=2e-4)
    assert jnp.allclose(state1, ref_state1, atol=2e-4, rtol=2e-4)

    print("KERNEL_OK")
</pallas_src>

<mosaic_0001>
module attributes {stable_mosaic.version = 11 : i64} {
  func.func @dsntli_kernel(%arg0: i32, %arg1: memref<16x2048xf32, #tpu.memory_space<vmem>>, %arg2: memref<2048x128xf32, #tpu.memory_space<vmem>>, %arg3: memref<16x128xf32, #tpu.memory_space<vmem>>) attributes {dimension_semantics = [#tpu.dimension_semantics<parallel>], iteration_bounds = array<i64: 1>, scalar_prefetch = 0 : i64, scratch_operands = 0 : i64, tpu.core_type = #tpu.core_type<tc>, window_params = [{transform_indices = @transform_0, window_bounds = array<i64: 16, 2048>}, {pipeline_mode = #tpu.pipeline_mode<synchronous>, transform_indices = @transform_1, window_bounds = array<i64: 2048, 128>}, {transform_indices = @transform_2, window_bounds = array<i64: 16, 128>}]} {
    %c0 = arith.constant 0 : index
    %c0_0 = arith.constant 0 : index
    %0 = vector.load %arg1[%c0, %c0_0] : memref<16x2048xf32, #tpu.memory_space<vmem>>, vector<16x2048xf32>
    %c0_1 = arith.constant 0 : index
    %c0_2 = arith.constant 0 : index
    %1 = vector.load %arg2[%c0_1, %c0_2] : memref<2048x128xf32, #tpu.memory_space<vmem>>, vector<2048x128xf32>
    %cst = arith.constant dense<0.000000e+00> : vector<16x128xf32>
    %2 = tpu.matmul %0, %1, %cst {dimension_numbers = #tpu.dot_dimension_numbers<[1], [0], [0], [1], [0, 0, 1, 1], [], []>} : vector<16x2048xf32>, vector<2048x128xf32>, vector<16x128xf32> -> vector<16x128xf32>
    %c0_3 = arith.constant 0 : index
    %c0_4 = arith.constant 0 : index
    %3 = vector.load %arg3[%c0_3, %c0_4] : memref<16x128xf32, #tpu.memory_space<vmem>>, vector<16x128xf32>
    tpu.vector_store %arg3[%c0_3, %c0_4], %2 {strides = array<i32>} : memref<16x128xf32, #tpu.memory_space<vmem>>, vector<16x128xf32>,
    return
  }
  func.func @transform_0(%arg0: i32) -> (i32, i32) {
    %c0_i32 = arith.constant 0 : i32
    %c0_i32_0 = arith.constant 0 : i32
    return %arg0, %c0_i32 : i32, i32
  }
  func.func @transform_1(%arg0: i32) -> (i32, i32) {
    %c0_i32 = arith.constant 0 : i32
    %c0_i32_0 = arith.constant 0 : i32
    %c0_i32_1 = arith.constant 0 : i32
    return %c0_i32, %c0_i32_0 : i32, i32
  }
  func.func @transform_2(%arg0: i32) -> (i32, i32) {
    %c0_i32 = arith.constant 0 : i32
    %c0_i32_0 = arith.constant 0 : i32
    return %arg0, %c0_i32 : i32, i32
  }
}

</mosaic_0001>

<llo_original>
// kernel: tpu_custom_call.1
$region0: #{tpu_custom_call.1}
  #allocation0 [shape = 'u32[]', space=smem, size = 0x4, offset = 0x4, fixed_abs, tag = 'smem constant byte address 0x4 - core index']
  #allocation1 [shape = 'u32[144,128]{1,0:T(1,128)}', space=vmem, size = 0x12000, scoped, tag = 'internal scratch']
  %s0 = inlined_call_operand.hbm [shape: f32[16,2048], index: 0, kind: input, shape index: {}]
  %s1 = inlined_call_operand.hbm [shape: f32[2048,128], index: 1, kind: input, shape index: {}]
  %s2 = inlined_call_operand.hbm [shape: f32[16,128], index: 2, kind: output, shape index: {}]
  %s3 = sld [smem:[#allocation0]]
  $region26: #{tpu_custom_call.1} parent=0
    _
  %s5 = ssub.s32 1, %s3
  %s6 = scalar_select 0, %s5, %s3
  $region1: #{tpu_custom_call.1} parent=0
    #allocation2 [shape = 'u8[131072]{0}', space=vmem, size = 0x20000, scoped, tag = 'input window, operand 0, single buffered']
    #allocation3 [shape = 's32[1]{0}', space=sflag, size = 0x4, scoped, tag = 'scoped memory for tpu_custom_call.1']
    #allocation4 [shape = 's32[1]{0}', space=sflag, size = 0x4, scoped, tag = 'scoped memory for tpu_custom_call.1']
    #allocation5 [shape = 'u8[1048576]{0}', space=vmem, size = 0x100000, scoped, tag = 'input window, operand 1, single buffered']
    #allocation6 [shape = 's32[1]{0}', space=sflag, size = 0x4, scoped, tag = 'scoped memory for tpu_custom_call.1']
    #allocation7 [shape = 'u8[8192]{0}', space=vmem, size = 0x2000, scoped, tag = 'output window, operand 0, single buffered']
    %7 = vsyncpa [#allocation3], 0
    %8 = vsyncpa [#allocation6], 0
    %9 = vsyncpa [#allocation4], 0
    // Predicated region
    $region2: #{tpu_custom_call.1} parent=1 // pred_check
      _
    $region3: #{tpu_custom_call.1} parent=1 // pred_check_branch
      %11 = sbr.rel (0) target = $region5
    $region4: #{tpu_custom_call.1} parent=1 // pred_region
      %s13 = ssub.s32 4096, 4096
      %14 = vsyncadd [#allocation3], %s13
      %s15 = sshll.u32 [#allocation2], 4
      %s16 = int_to_ptr.vmem [resolvable:$true] %s15
      %21 = dma.hbm_to_vmem [thread:$0]  %s0, 4096, %s16, [#allocation3], 2048, 2048, 128
    $region5: #{tpu_custom_call.1} parent=1 // pred_fallthru
      _
    // Predicated region
    $region6: #{tpu_custom_call.1} parent=1 // pred_check
      _
    $region7: #{tpu_custom_call.1} parent=1 // pred_check_branch
      %23 = sbr.rel (0) target = $region9
    $region8: #{tpu_custom_call.1} parent=1 // pred_region
      %s25 = ssub.s32 32768, 32768
      %26 = vsyncadd [#allocation6], %s25
      %s27 = sshll.u32 [#allocation5], 4
      %s28 = int_to_ptr.vmem [resolvable:$true] %s27
      %33 = dma.hbm_to_vmem [thread:$0]  %s1, 32768, %s28, [#allocation6], 128, 128, 8
    $region9: #{tpu_custom_call.1} parent=1 // pred_fallthru
      _
    // Predicated region
    $region10: #{tpu_custom_call.1} parent=1 // pred_check
      _
    $region11: #{tpu_custom_call.1} parent=1 // pred_check_branch
      %35 = sbr.rel (0) target = $region13
    $region12: #{tpu_custom_call.1} parent=1 // pred_region
      %36 = dma.done [#allocation3], 4096
    $region13: #{tpu_custom_call.1} parent=1 // pred_fallthru
      _
    // Predicated region
    $region14: #{tpu_custom_call.1} parent=1 // pred_check
      _
    $region15: #{tpu_custom_call.1} parent=1 // pred_check_branch
      %38 = sbr.rel (0) target = $region17
    $region16: #{tpu_custom_call.1} parent=1 // pred_region
      %39 = dma.done [#allocation6], 32768
    $region17: #{tpu_custom_call.1} parent=1 // pred_fallthru
      _
    %v40 = vld [vmem:[#allocation2] sm:$0xff]
    %v41 = vld [vmem:[#allocation2 + $0x8] sm:$0xff]
    %v42 = vld [vmem:[#allocation2 + $0x10] sm:$0xff]
    %v43 = vld [vmem:[#allocation2 + $0x18] sm:$0xff]
    %v44 = vld [vmem:[#allocation2 + $0x20] sm:$0xff]
    %v45 = vld [vmem:[#allocation2 + $0x28] sm:$0xff]
    %v46 = vld [vmem:[#allocation2 + $0x30] sm:$0xff]
    %v47 = vld [vmem:[#allocation2 + $0x38] sm:$0xff]
    %v48 = vld [vmem:[#allocation2 + $0x40] sm:$0xff]
    %v49 = vld [vmem:[#allocation2 + $0x48] sm:$0xff]
    %v50 = vld [vmem:[#allocation2 + $0x50] sm:$0xff]
    %v51 = vld [vmem:[#allocation2 + $0x58] sm:$0xff]
    %v52 = vld [vmem:[#allocation2 + $0x60] sm:$0xff]
    %v53 = vld [vmem:[#allocation2 + $0x68] sm:$0xff]
    %v54 = vld [vmem:[#allocation2 + $0x70] sm:$0xff]
    %v55 = vld [vmem:[#allocation2 + $0x78] sm:$0xff]
    %v56 = vld [vmem:[#allocation2 + $0x80] sm:$0xff]
    %v57 = vld [vmem:[#allocation2 + $0x88] sm:$0xff]
    %v58 = vld [vmem:[#allocation2 + $0x90] sm:$0xff]
    %v59 = vld [vmem:[#allocation2 + $0x98] sm:$0xff]
    %v60 = vld [vmem:[#allocation2 + $0xa0] sm:$0xff]
    %v61 = vld [vmem:[#allocation2 + $0xa8] sm:$0xff]
    %v62 = vld [vmem:[#allocation2 + $0xb0] sm:$0xff]
    %v63 = vld [vmem:[#allocation2 + $0xb8] sm:$0xff]
    %v64 = vld [vmem:[#allocation2 + $0xc0] sm:$0xff]
    %v65 = vld [vmem:[#allocation2 + $0xc8] sm:$0xff]
    %v66 = vld [vmem:[#allocation2 + $0xd0] sm:$0xff]
    %v67 = vld [vmem:[#allocation2 + $0xd8] sm:$0xff]
    %v68 = vld [vmem:[#allocation2 + $0xe0] sm:$0xff]
    %v69 = vld [vmem:[#allocation2 + $0xe8] sm:$0xff]
    %v70 = vld [vmem:[#allocation2 + $0xf0] sm:$0xff]
    %v71 = vld [vmem:[#allocation2 + $0xf8] sm:$0xff]
    %v72 = vld [vmem:[#allocation5] sm:$0xff]
    %v73 = vld [vmem:[#allocation5 + $0x8] sm:$0xff]
    %v74 = vld [vmem:[#allocation5 + $0x10] sm:$0xff]
    %v75 = vld [vmem:[#allocation5 + $0x18] sm:$0xff]
    %v76 = vld [vmem:[#allocation5 + $0x20] sm:$0xff]
    %v77 = vld [vmem:[#allocation5 + $0x28] sm:$0xff]
    %v78 = vld [vmem:[#allocation5 + $0x30] sm:$0xff]
    %v79 = vld [vmem:[#allocation5 + $0x38] sm:$0xff]
    %v80 = vld [vmem:[#allocation5 + $0x40] sm:$0xff]
    %v81 = vld [vmem:[#allocation5 + $0x48] sm:$0xff]
    %v82 = vld [vmem:[#allocation5 + $0x50] sm:$0xff]
    %v83 = vld [vmem:[#allocation5 + $0x58] sm:$0xff]
    %v84 = vld [vmem:[#allocation5 + $0x60] sm:$0xff]
    %v85 = vld [vmem:[#allocation5 + $0x68] sm:$0xff]
    %v86 = vld [vmem:[#allocation5 + $0x70] sm:$0xff]
    %v87 = vld [vmem:[#allocation5 + $0x78] sm:$0xff]
    %v88 = vld [vmem:[#allocation5 + $0x80] sm:$0xff]
    %v89 = vld [vmem:[#allocation5 + $0x88] sm:$0xff]
    %v90 = vld [vmem:[#allocation5 + $0x90] sm:$0xff]
    %v91 = vld [vmem:[#allocation5 + $0x98] sm:$0xff]
    %v92 = vld [vmem:[#allocation5 + $0xa0] sm:$0xff]
    %v93 = vld [vmem:[#allocation5 + $0xa8] sm:$0xff]
    %v94 = vld [vmem:[#allocation5 + $0xb0] sm:$0xff]
    %v95 = vld [vmem:[#allocation5 + $0xb8] sm:$0xff]
    %v96 = vld [vmem:[#allocation5 + $0xc0] sm:$0xff]
    %v97 = vld [vmem:[#allocation5 + $0xc8] sm:$0xff]
    %v98 = vld [vmem:[#allocation5 + $0xd0] sm:$0xff]
    %v99 = vld [vmem:[#allocation5 + $0xd8] sm:$0xff]
    %v100 = vld [vmem:[#allocation5 + $0xe0] sm:$0xff]
    %v101 = vld [vmem:[#allocation5 + $0xe8] sm:$0xff]
    %v102 = vld [vmem:[#allocation5 + $0xf0] sm:$0xff]
    %v103 = vld [vmem:[#allocation5 + $0xf8] sm:$0xff]
    %v104 = vld [vmem:[#allocation5 + $0x100] sm:$0xff]
    %v105 = vld [vmem:[#allocation5 + $0x108] sm:$0xff]
    %v106 = vld [vmem:[#allocation5 + $0x110] sm:$0xff]
    %v107 = vld [vmem:[#allocation5 + $0x118] sm:$0xff]
    %v108 = vld [vmem:[#allocation5 + $0x120] sm:$0xff]
    %v109 = vld [vmem:[#allocation5 + $0x128] sm:$0xff]
    %v110 = vld [vmem:[#allocation5 + $0x130] sm:$0xff]
    %v111 = vld [vmem:[#allocation5 + $0x138] sm:$0xff]
    %v112 = vld [vmem:[#allocation5 + $0x140] sm:$0xff]
    %v113 = vld [vmem:[#allocation5 + $0x148] sm:$0xff]
    %v114 = vld [vmem:[#allocation5 + $0x150] sm:$0xff]
    %v115 = vld [vmem:[#allocation5 + $0x158] sm:$0xff]
    %v116 = vld [vmem:[#allocation5 + $0x160] sm:$0xff]
    %v117 = vld [vmem:[#allocation5 + $0x168] sm:$0xff]
    %v118 = vld [vmem:[#allocation5 + $0x170] sm:$0xff]
    %v119 = vld [vmem:[#allocation5 + $0x178] sm:$0xff]
    %v120 = vld [vmem:[#allocation5 + $0x180] sm:$0xff]
    %v121 = vld [vmem:[#allocation5 + $0x188] sm:$0xff]
    %v122 = vld [vmem:[#allocation5 + $0x190] sm:$0xff]
    %v123 = vld [vmem:[#allocation5 + $0x198] sm:$0xff]
    %v124 = vld [vmem:[#allocation5 + $0x1a0] sm:$0xff]
    %v125 = vld [vmem:[#allocation5 + $0x1a8] sm:$0xff]
    %v126 = vld [vmem:[#allocation5 + $0x1b0] sm:$0xff]
    %v127 = vld [vmem:[#allocation5 + $0x1b8] sm:$0xff]
    %v128 = vld [vmem:[#allocation5 + $0x1c0] sm:$0xff]
    %v129 = vld [vmem:[#allocation5 + $0x1c8] sm:$0xff]
    %v130 = vld [vmem:[#allocation5 + $0x1d0] sm:$0xff]
    %v131 = vld [vmem:[#allocation5 + $0x1d8] sm:$0xff]
    %v132 = vld [vmem:[#allocation5 + $0x1e0] sm:$0xff]
    %v133 = vld [vmem:[#allocation5 + $0x1e8] sm:$0xff]
    %v134 = vld [vmem:[#allocation5 + $0x1f0] sm:$0xff]
    %v135 = vld [vmem:[#allocation5 + $0x1f8] sm:$0xff]
    %v136 = vld [vmem:[#allocation5 + $0x200] sm:$0xff]
    %v137 = vld [vmem:[#allocation5 + $0x208] sm:$0xff]
    %v138 = vld [vmem:[#allocation5 + $0x210] sm:$0xff]
    %v139 = vld [vmem:[#allocation5 + $0x218] sm:$0xff]
    %v140 = vld [vmem:[#allocation5 + $0x220] sm:$0xff]
    %v141 = vld [vmem:[#allocation5 + $0x228] sm:$0xff]
    %v142 = vld [vmem:[#allocation5 + $0x230] sm:$0xff]
    %v143 = vld [vmem:[#allocation5 + $0x238] sm:$0xff]
    %v144 = vld [vmem:[#allocation5 + $0x240] sm:$0xff]
    %v145 = vld [vmem:[#allocation5 + $0x248] sm:$0xff]
    %v146 = vld [vmem:[#allocation5 + $0x250] sm:$0xff]
    %v147 = vld [vmem:[#allocation5 + $0x258] sm:$0xff]
    %v148 = vld [vmem:[#allocation5 + $0x260] sm:$0xff]
    %v149 = vld [vmem:[#allocation5 + $0x268] sm:$0xff]
    %v150 = vld [vmem:[#allocation5 + $0x270] sm:$0xff]
    %v151 = vld [vmem:[#allocation5 + $0x278] sm:$0xff]
    %v152 = vld [vmem:[#allocation5 + $0x280] sm:$0xff]
    %v153 = vld [vmem:[#allocation5 + $0x288] sm:$0xff]
    %v154 = vld [vmem:[#allocation5 + $0x290] sm:$0xff]
    %v155 = vld [vmem:[#allocation5 + $0x298] sm:$0xff]
    %v156 = vld [vmem:[#allocation5 + $0x2a0] sm:$0xff]
    %v157 = vld [vmem:[#allocation5 + $0x2a8] sm:$0xff]
    %v158 = vld [vmem:[#allocation5 + $0x2b0] sm:$0xff]
    %v159 = vld [vmem:[#allocation5 + $0x2b8] sm:$0xff]
    %v160 = vld [vmem:[#allocation5 + $0x2c0] sm:$0xff]
    %v161 = vld [vmem:[#allocation5 + $0x2c8] sm:$0xff]
    %v162 = vld [vmem:[#allocation5 + $0x2d0] sm:$0xff]
    %v163 = vld [vmem:[#allocation5 + $0x2d8] sm:$0xff]
    %v164 = vld [vmem:[#allocation5 + $0x2e0] sm:$0xff]
    %v165 = vld [vmem:[#allocation5 + $0x2e8] sm:$0xff]
    %v166 = vld [vmem:[#allocation5 + $0x2f0] sm:$0xff]
    %v167 = vld [vmem:[#allocation5 + $0x2f8] sm:$0xff]
    %v168 = vld [vmem:[#allocation5 + $0x300] sm:$0xff]
    %v169 = vld [vmem:[#allocation5 + $0x308] sm:$0xff]
    %v170 = vld [vmem:[#allocation5 + $0x310] sm:$0xff]
    %v171 = vld [vmem:[#allocation5 + $0x318] sm:$0xff]
    %v172 = vld [vmem:[#allocation5 + $0x320] sm:$0xff]
    %v173 = vld [vmem:[#allocation5 + $0x328] sm:$0xff]
    %v174 = vld [vmem:[#allocation5 + $0x330] sm:$0xff]
    %v175 = vld [vmem:[#allocation5 + $0x338] sm:$0xff]
    %v176 = vld [vmem:[#allocation5 + $0x340] sm:$0xff]
    %v177 = vld [vmem:[#allocation5 + $0x348] sm:$0xff]
    %v178 = vld [vmem:[#allocation5 + $0x350] sm:$0xff]
    %v179 = vld [vmem:[#allocation5 + $0x358] sm:$0xff]
    %v180 = vld [vmem:[#allocation5 + $0x360] sm:$0xff]
    %v181 = vld [vmem:[#allocation5 + $0x368] sm:$0xff]
    %v182 = vld [vmem:[#allocation5 + $0x370] sm:$0xff]
    %v183 = vld [vmem:[#allocation5 + $0x378] sm:$0xff]
    %v184 = vld [vmem:[#allocation5 + $0x380] sm:$0xff]
    %v185 = vld [vmem:[#allocation5 + $0x388] sm:$0xff]
    %v186 = vld [vmem:[#allocation5 + $0x390] sm:$0xff]
    %v187 = vld [vmem:[#allocation5 + $0x398] sm:$0xff]
    %v188 = vld [vmem:[#allocation5 + $0x3a0] sm:$0xff]
    %v189 = vld [vmem:[#allocation5 + $0x3a8] sm:$0xff]
    %v190 = vld [vmem:[#allocation5 + $0x3b0] sm:$0xff]
    %v191 = vld [vmem:[#allocation5 + $0x3b8] sm:$0xff]
    %v192 = vld [vmem:[#allocation5 + $0x3c0] sm:$0xff]
    %v193 = vld [vmem:[#allocation5 + $0x3c8] sm:$0xff]
    %v194 = vld [vmem:[#allocation5 + $0x3d0] sm:$0xff]
    %v195 = vld [vmem:[#allocation5 + $0x3d8] sm:$0xff]
    %v196 = vld [vmem:[#allocation5 + $0x3e0] sm:$0xff]
    %v197 = vld [vmem:[#allocation5 + $0x3e8] sm:$0xff]
    %v198 = vld [vmem:[#allocation5 + $0x3f0] sm:$0xff]
    %v199 = vld [vmem:[#allocation5 + $0x3f8] sm:$0xff]
    %v200 = vld [vmem:[#allocation5 + $0x400] sm:$0xff]
    %v201 = vld [vmem:[#allocation5 + $0x408] sm:$0xff]
    %v202 = vld [vmem:[#allocation5 + $0x410] sm:$0xff]
    %v203 = vld [vmem:[#allocation5 + $0x418] sm:$0xff]
    %v204 = vld [vmem:[#allocation5 + $0x420] sm:$0xff]
    %v205 = vld [vmem:[#allocation5 + $0x428] sm:$0xff]
    %v206 = vld [vmem:[#allocation5 + $0x430] sm:$0xff]
    %v207 = vld [vmem:[#allocation5 + $0x438] sm:$0xff]
    %v208 = vld [vmem:[#allocation5 + $0x440] sm:$0xff]
    %v209 = vld [vmem:[#allocation5 + $0x448] sm:$0xff]
    %v210 = vld [vmem:[#allocation5 + $0x450] sm:$0xff]
    %v211 = vld [vmem:[#allocation5 + $0x458] sm:$0xff]
    %v212 = vld [vmem:[#allocation5 + $0x460] sm:$0xff]
    %v213 = vld [vmem:[#allocation5 + $0x468] sm:$0xff]
    %v214 = vld [vmem:[#allocation5 + $0x470] sm:$0xff]
    %v215 = vld [vmem:[#allocation5 + $0x478] sm:$0xff]
    %v216 = vld [vmem:[#allocation5 + $0x480] sm:$0xff]
    %v217 = vld [vmem:[#allocation5 + $0x488] sm:$0xff]
    %v218 = vld [vmem:[#allocation5 + $0x490] sm:$0xff]
    %v219 = vld [vmem:[#allocation5 + $0x498] sm:$0xff]
    %v220 = vld [vmem:[#allocation5 + $0x4a0] sm:$0xff]
    %v221 = vld [vmem:[#allocation5 + $0x4a8] sm:$0xff]
    %v222 = vld [vmem:[#allocation5 + $0x4b0] sm:$0xff]
    %v223 = vld [vmem:[#allocation5 + $0x4b8] sm:$0xff]
    %v224 = vld [vmem:[#allocation5 + $0x4c0] sm:$0xff]
    %v225 = vld [vmem:[#allocation5 + $0x4c8] sm:$0xff]
    %v226 = vld [vmem:[#allocation5 + $0x4d0] sm:$0xff]
    %v227 = vld [vmem:[#allocation5 + $0x4d8] sm:$0xff]
    %v228 = vld [vmem:[#allocation5 + $0x4e0] sm:$0xff]
    %v229 = vld [vmem:[#allocation5 + $0x4e8] sm:$0xff]
    %v230 = vld [vmem:[#allocation5 + $0x4f0] sm:$0xff]
    %v231 = vld [vmem:[#allocation5 + $0x4f8] sm:$0xff]
    %v232 = vld [vmem:[#allocation5 + $0x500] sm:$0xff]
    %v233 = vld [vmem:[#allocation5 + $0x508] sm:$0xff]
    %v234 = vld [vmem:[#allocation5 + $0x510] sm:$0xff]
    %v235 = vld [vmem:[#allocation5 + $0x518] sm:$0xff]
    %v236 = vld [vmem:[#allocation5 + $0x520] sm:$0xff]
    %v237 = vld [vmem:[#allocation5 + $0x528] sm:$0xff]
    %v238 = vld [vmem:[#allocation5 + $0x530] sm:$0xff]
    %v239 = vld [vmem:[#allocation5 + $0x538] sm:$0xff]
    %v240 = vld [vmem:[#allocation5 + $0x540] sm:$0xff]
    %v241 = vld [vmem:[#allocation5 + $0x548] sm:$0xff]
    %v242 = vld [vmem:[#allocation5 + $0x550] sm:$0xff]
    %v243 = vld [vmem:[#allocation5 + $0x558] sm:$0xff]
    %v244 = vld [vmem:[#allocation5 + $0x560] sm:$0xff]
    %v245 = vld [vmem:[#allocation5 + $0x568] sm:$0xff]
    %v246 = vld [vmem:[#allocation5 + $0x570] sm:$0xff]
    %v247 = vld [vmem:[#allocation5 + $0x578] sm:$0xff]
    %v248 = vld [vmem:[#allocation5 + $0x580] sm:$0xff]
    %v249 = vld [vmem:[#allocation5 + $0x588] sm:$0xff]
    %v250 = vld [vmem:[#allocation5 + $0x590] sm:$0xff]
    %v251 = vld [vmem:[#allocation5 + $0x598] sm:$0xff]
    %v252 = vld [vmem:[#allocation5 + $0x5a0] sm:$0xff]
    %v253 = vld [vmem:[#allocation5 + $0x5a8] sm:$0xff]
    %v254 = vld [vmem:[#allocation5 + $0x5b0] sm:$0xff]
    %v255 = vld [vmem:[#allocation5 + $0x5b8] sm:$0xff]
    %v256 = vld [vmem:[#allocation5 + $0x5c0] sm:$0xff]
    %v257 = vld [vmem:[#allocation5 + $0x5c8] sm:$0xff]
    %v258 = vld [vmem:[#allocation5 + $0x5d0] sm:$0xff]
    %v259 = vld [vmem:[#allocation5 + $0x5d8] sm:$0xff]
    %v260 = vld [vmem:[#allocation5 + $0x5e0] sm:$0xff]
    %v261 = vld [vmem:[#allocation5 + $0x5e8] sm:$0xff]
    %v262 = vld [vmem:[#allocation5 + $0x5f0] sm:$0xff]
    %v263 = vld [vmem:[#allocation5 + $0x5f8] sm:$0xff]
    %v264 = vld [vmem:[#allocation5 + $0x600] sm:$0xff]
    %v265 = vld [vmem:[#allocation5 + $0x608] sm:$0xff]
    %v266 = vld [vmem:[#allocation5 + $0x610] sm:$0xff]
    %v267 = vld [vmem:[#allocation5 + $0x618] sm:$0xff]
    %v268 = vld [vmem:[#allocation5 + $0x620] sm:$0xff]
    %v269 = vld [vmem:[#allocation5 + $0x628] sm:$0xff]
    %v270 = vld [vmem:[#allocation5 + $0x630] sm:$0xff]
    %v271 = vld [vmem:[#allocation5 + $0x638] sm:$0xff]
    %v272 = vld [vmem:[#allocation5 + $0x640] sm:$0xff]
    %v273 = vld [vmem:[#allocation5 + $0x648] sm:$0xff]
    %v274 = vld [vmem:[#allocation5 + $0x650] sm:$0xff]
    %v275 = vld [vmem:[#allocation5 + $0x658] sm:$0xff]
    %v276 = vld [vmem:[#allocation5 + $0x660] sm:$0xff]
    %v277 = vld [vmem:[#allocation5 + $0x668] sm:$0xff]
    %v278 = vld [vmem:[#allocation5 + $0x670] sm:$0xff]
    %v279 = vld [vmem:[#allocation5 + $0x678] sm:$0xff]
    %v280 = vld [vmem:[#allocation5 + $0x680] sm:$0xff]
    %v281 = vld [vmem:[#allocation5 + $0x688] sm:$0xff]
    %v282 = vld [vmem:[#allocation5 + $0x690] sm:$0xff]
    %v283 = vld [vmem:[#allocation5 + $0x698] sm:$0xff]
    %v284 = vld [vmem:[#allocation5 + $0x6a0] sm:$0xff]
    %v285 = vld [vmem:[#allocation5 + $0x6a8] sm:$0xff]
    %v286 = vld [vmem:[#allocation5 + $0x6b0] sm:$0xff]
    %v287 = vld [vmem:[#allocation5 + $0x6b8] sm:$0xff]
    %v288 = vld [vmem:[#allocation5 + $0x6c0] sm:$0xff]
    %v289 = vld [vmem:[#allocation5 + $0x6c8] sm:$0xff]
    %v290 = vld [vmem:[#allocation5 + $0x6d0] sm:$0xff]
    %v291 = vld [vmem:[#allocation5 + $0x6d8] sm:$0xff]
    %v292 = vld [vmem:[#allocation5 + $0x6e0] sm:$0xff]
    %v293 = vld [vmem:[#allocation5 + $0x6e8] sm:$0xff]
    %v294 = vld [vmem:[#allocation5 + $0x6f0] sm:$0xff]
    %v295 = vld [vmem:[#allocation5 + $0x6f8] sm:$0xff]
    %v296 = vld [vmem:[#allocation5 + $0x700] sm:$0xff]
    %v297 = vld [vmem:[#allocation5 + $0x708] sm:$0xff]
    %v298 = vld [vmem:[#allocation5 + $0x710] sm:$0xff]
    %v299 = vld [vmem:[#allocation5 + $0x718] sm:$0xff]
    %v300 = vld [vmem:[#allocation5 + $0x720] sm:$0xff]
    %v301 = vld [vmem:[#allocation5 + $0x728] sm:$0xff]
    %v302 = vld [vmem:[#allocation5 + $0x730] sm:$0xff]
    %v303 = vld [vmem:[#allocation5 + $0x738] sm:$0xff]
    %v304 = vld [vmem:[#allocation5 + $0x740] sm:$0xff]
    %v305 = vld [vmem:[#allocation5 + $0x748] sm:$0xff]
    %v306 = vld [vmem:[#allocation5 + $0x750] sm:$0xff]
    %v307 = vld [vmem:[#allocation5 + $0x758] sm:$0xff]
    %v308 = vld [vmem:[#allocation5 + $0x760] sm:$0xff]
    %v309 = vld [vmem:[#allocation5 + $0x768] sm:$0xff]
    %v310 = vld [vmem:[#allocation5 + $0x770] sm:$0xff]
    %v311 = vld [vmem:[#allocation5 + $0x778] sm:$0xff]
    %v312 = vld [vmem:[#allocation5 + $0x780] sm:$0xff]
    %v313 = vld [vmem:[#allocation5 + $0x788] sm:$0xff]
    %v314 = vld [vmem:[#allocation5 + $0x790] sm:$0xff]
    %v315 = vld [vmem:[#allocation5 + $0x798] sm:$0xff]
    %v316 = vld [vmem:[#allocation5 + $0x7a0] sm:$0xff]
    %v317 = vld [vmem:[#allocation5 + $0x7a8] sm:$0xff]
    %v318 = vld [vmem:[#allocation5 + $0x7b0] sm:$0xff]
    %v319 = vld [vmem:[#allocation5 + $0x7b8] sm:$0xff]
    %v320 = vld [vmem:[#allocation5 + $0x7c0] sm:$0xff]
    %v321 = vld [vmem:[#allocation5 + $0x7c8] sm:$0xff]
    %v322 = vld [vmem:[#allocation5 + $0x7d0] sm:$0xff]
    %v323 = vld [vmem:[#allocation5 + $0x7d8] sm:$0xff]
    %v324 = vld [vmem:[#allocation5 + $0x7e0] sm:$0xff]
    %v325 = vld [vmem:[#allocation5 + $0x7e8] sm:$0xff]
    %v326 = vld [vmem:[#allocation5 + $0x7f0] sm:$0xff]
    %v327 = vld [vmem:[#allocation5 + $0x7f8] sm:$0xff]
    %328 = vmatprep.subr.mxu0 0.0
    %329 = vmatpush1.msra.mxu0 %v72
    %330 = vmatprep.subr.mxu0 0.0
    %331 = vmatpush1.msra.mxu0 %v73
    %332 = vmatprep.subr.mxu0 0.0
    %333 = vmatpush1.msra.mxu0 %v74
    %334 = vmatprep.subr.mxu0 0.0
    %335 = vmatpush1.msra.mxu0 %v75
    %336 = vmatprep.subr.mxu0 0.0
    %337 = vmatpush1.msra.mxu0 %v76
    %338 = vmatprep.subr.mxu0 0.0
    %339 = vmatpush1.msra.mxu0 %v77
    %340 = vmatprep.subr.mxu0 0.0
    %341 = vmatpush1.msra.mxu0 %v78
    %342 = vmatprep.subr.mxu0 0.0
    %343 = vmatpush1.msra.mxu0 %v79
    %344 = vmatprep.subr.mxu0 0.0
    %345 = vmatpush1.msra.mxu0 %v80
    %346 = vmatprep.subr.mxu0 0.0
    %347 = vmatpush1.msra.mxu0 %v81
    %348 = vmatprep.subr.mxu0 0.0
    %349 = vmatpush1.msra.mxu0 %v82
    %350 = vmatprep.subr.mxu0 0.0
    %351 = vmatpush1.msra.mxu0 %v83
    %352 = vmatprep.subr.mxu0 0.0
    %353 = vmatpush1.msra.mxu0 %v84
    %354 = vmatprep.subr.mxu0 0.0
    %355 = vmatpush1.msra.mxu0 %v85
    %356 = vmatprep.subr.mxu0 0.0
    %357 = vmatpush1.msra.mxu0 %v86
    %358 = vmatprep.subr.mxu0 0.0
    %359 = vmatpush1.msra.mxu0 %v87
    %360 = vmatprep.subr.mxu0 0.0
    %361 = vmatpush1.msra.mxu0 %v88
    %362 = vmatprep.subr.mxu0 0.0
    %363 = vmatpush1.msra.mxu0 %v89
    %364 = vmatprep.subr.mxu0 0.0
    %365 = vmatpush1.msra.mxu0 %v90
    %366 = vmatprep.subr.mxu0 0.0
    %367 = vmatpush1.msra.mxu0 %v91
    %368 = vmatprep.subr.mxu0 0.0
    %369 = vmatpush1.msra.mxu0 %v92
    %370 = vmatprep.subr.mxu0 0.0
    %371 = vmatpush1.msra.mxu0 %v93
    %372 = vmatprep.subr.mxu0 0.0
    %373 = vmatpush1.msra.mxu0 %v94
    %374 = vmatprep.subr.mxu0 0.0
    %375 = vmatpush1.msra.mxu0 %v95
    %376 = vmatprep.subr.mxu0 0.0
    %377 = vmatpush1.msra.mxu0 %v96
    %378 = vmatprep.subr.mxu0 0.0
    %379 = vmatpush1.msra.mxu0 %v97
    %380 = vmatprep.subr.mxu0 0.0
    %381 = vmatpush1.msra.mxu0 %v98
    %382 = vmatprep.subr.mxu0 0.0
    %383 = vmatpush1.msra.mxu0 %v99
    %384 = vmatprep.subr.mxu0 0.0
    %385 = vmatpush1.msra.mxu0 %v100
    %386 = vmatprep.subr.mxu0 0.0
    %387 = vmatpush1.msra.mxu0 %v101
    %388 = vmatprep.subr.mxu0 0.0
    %389 = vmatpush1.msra.mxu0 %v102
    %390 = vmatprep.subr.mxu0 0.0
    %391 = vmatpush1.msra.mxu0 %v103
    %392 = vmatprep.mubr.f32.mxu0 %v41
    %393 = vmatmul.mubr.f32.gmra.mrb[0].mxu0 %v40
    %v394 = vpop.f32.mrb[0].mxu0
    %v395 = vadd.f32 0.0, %v394
    %v396 = vpop.f32.mrb[0].mxu0
    %397 = vmatprep.mubr.f32.mxu0 %v57
    %398 = vmatmul.mubr.f32.gmra.mrb[0].mxu0 %v56
    %v399 = vpop.f32.mrb[0].mxu0
    %v400 = vadd.f32 0.0, %v399
    %v401 = vpop.f32.mrb[0].mxu0
    %402 = vdwg.mxu0
    %403 = vmatprep.subr.mxu0 0.0
    %404 = vmatpush1.msra.mxu0 %v104
    %405 = vmatprep.subr.mxu0 0.0
    %406 = vmatpush1.msra.mxu0 %v105
    %407 = vmatprep.subr.mxu0 0.0
    %408 = vmatpush1.msra.mxu0 %v106
    %409 = vmatprep.subr.mxu0 0.0
    %410 = vmatpush1.msra.mxu0 %v107
    %411 = vmatprep.subr.mxu0 0.0
    %412 = vmatpush1.msra.mxu0 %v108
    %413 = vmatprep.subr.mxu0 0.0
    %414 = vmatpush1.msra.mxu0 %v109
    %415 = vmatprep.subr.mxu0 0.0
    %416 = vmatpush1.msra.mxu0 %v110
    %417 = vmatprep.subr.mxu0 0.0
    %418 = vmatpush1.msra.mxu0 %v111
    %419 = vmatprep.subr.mxu0 0.0
    %420 = vmatpush1.msra.mxu0 %v112
    %421 = vmatprep.subr.mxu0 0.0
    %422 = vmatpush1.msra.mxu0 %v113
    %423 = vmatprep.subr.mxu0 0.0
    %424 = vmatpush1.msra.mxu0 %v114
    %425 = vmatprep.subr.mxu0 0.0
    %426 = vmatpush1.msra.mxu0 %v115
    %427 = vmatprep.subr.mxu0 0.0
    %428 = vmatpush1.msra.mxu0 %v116
    %429 = vmatprep.subr.mxu0 0.0
    %430 = vmatpush1.msra.mxu0 %v117
    %431 = vmatprep.subr.mxu0 0.0
    %432 = vmatpush1.msra.mxu0 %v118
    %433 = vmatprep.subr.mxu0 0.0
    %434 = vmatpush1.msra.mxu0 %v119
    %435 = vmatprep.subr.mxu0 0.0
    %436 = vmatpush1.msra.mxu0 %v120
    %437 = vmatprep.subr.mxu0 0.0
    %438 = vmatpush1.msra.mxu0 %v121
    %439 = vmatprep.subr.mxu0 0.0
    %440 = vmatpush1.msra.mxu0 %v122
    %441 = vmatprep.subr.mxu0 0.0
    %442 = vmatpush1.msra.mxu0 %v123
    %443 = vmatprep.subr.mxu0 0.0
    %444 = vmatpush1.msra.mxu0 %v124
    %445 = vmatprep.subr.mxu0 0.0
    %446 = vmatpush1.msra.mxu0 %v125
    %447 = vmatprep.subr.mxu0 0.0
    %448 = vmatpush1.msra.mxu0 %v126
    %449 = vmatprep.subr.mxu0 0.0
    %450 = vmatpush1.msra.mxu0 %v127
    %451 = vmatprep.subr.mxu0 0.0
    %452 = vmatpush1.msra.mxu0 %v128
    %453 = vmatprep.subr.mxu0 0.0
    %454 = vmatpush1.msra.mxu0 %v129
    %455 = vmatprep.subr.mxu0 0.0
    %456 = vmatpush1.msra.mxu0 %v130
    %457 = vmatprep.subr.mxu0 0.0
    %458 = vmatpush1.msra.mxu0 %v131
    %459 = vmatprep.subr.mxu0 0.0
    %460 = vmatpush1.msra.mxu0 %v132
    %461 = vmatprep.subr.mxu0 0.0
    %462 = vmatpush1.msra.mxu0 %v133
    %463 = vmatprep.subr.mxu0 0.0
    %464 = vmatpush1.msra.mxu0 %v134
    %465 = vmatprep.subr.mxu0 0.0
    %466 = vmatpush1.msra.mxu0 %v135
    %467 = vmatprep.mubr.f32.mxu0 %v43
    %468 = vmatmul.mubr.f32.gmra.mrb[0].mxu0 %v42
    %v469 = vpop.f32.mrb[0].mxu0
    %v470 = vadd.f32 %v395, %v469
    %v471 = vpop.f32.mrb[0].mxu0
    %472 = vmatprep.mubr.f32.mxu0 %v59
    %473 = vmatmul.mubr.f32.gmra.mrb[0].mxu0 %v58
    %v474 = vpop.f32.mrb[0].mxu0
    %v475 = vadd.f32 %v400, %v474
    %v476 = vpop.f32.mrb[0].mxu0
    %477 = vdwg.mxu0
    %478 = vmatprep.subr.mxu0 0.0
    %479 = vmatpush1.msra.mxu0 %v136
    %480 = vmatprep.subr.mxu0 0.0
    %481 = vmatpush1.msra.mxu0 %v137
    %482 = vmatprep.subr.mxu0 0.0
    %483 = vmatpush1.msra.mxu0 %v138
    %484 = vmatprep.subr.mxu0 0.0
    %485 = vmatpush1.msra.mxu0 %v139
    %486 = vmatprep.subr.mxu0 0.0
    %487 = vmatpush1.msra.mxu0 %v140
    %488 = vmatprep.subr.mxu0 0.0
    %489 = vmatpush1.msra.mxu0 %v141
    %490 = vmatprep.subr.mxu0 0.0
    %491 = vmatpush1.msra.mxu0 %v142
    %492 = vmatprep.subr.mxu0 0.0
    %493 = vmatpush1.msra.mxu0 %v143
    %494 = vmatprep.subr.mxu0 0.0
    %495 = vmatpush1.msra.mxu0 %v144
    %496 = vmatprep.subr.mxu0 0.0
    %497 = vmatpush1.msra.mxu0 %v145
    %498 = vmatprep.subr.mxu0 0.0
    %499 = vmatpush1.msra.mxu0 %v146
    %500 = vmatprep.subr.mxu0 0.0
    %501 = vmatpush1.msra.mxu0 %v147
    %502 = vmatprep.subr.mxu0 0.0
    %503 = vmatpush1.msra.mxu0 %v148
    %504 = vmatprep.subr.mxu0 0.0
    %505 = vmatpush1.msra.mxu0 %v149
    %506 = vmatprep.subr.mxu0 0.0
    %507 = vmatpush1.msra.mxu0 %v150
    %508 = vmatprep.subr.mxu0 0.0
    %509 = vmatpush1.msra.mxu0 %v151
    %510 = vmatprep.subr.mxu0 0.0
    %511 = vmatpush1.msra.mxu0 %v152
    %512 = vmatprep.subr.mxu0 0.0
    %513 = vmatpush1.msra.mxu0 %v153
    %514 = vmatprep.subr.mxu0 0.0
    %515 = vmatpush1.msra.mxu0 %v154
    %516 = vmatprep.subr.mxu0 0.0
    %517 = vmatpush1.msra.mxu0 %v155
    %518 = vmatprep.subr.mxu0 0.0
    %519 = vmatpush1.msra.mxu0 %v156
    %520 = vmatprep.subr.mxu0 0.0
    %521 = vmatpush1.msra.mxu0 %v157
    %522 = vmatprep.subr.mxu0 0.0
    %523 = vmatpush1.msra.mxu0 %v158
    %524 = vmatprep.subr.mxu0 0.0
    %525 = vmatpush1.msra.mxu0 %v159
    %526 = vmatprep.subr.mxu0 0.0
    %527 = vmatpush1.msra.mxu0 %v160
    %528 = vmatprep.subr.mxu0 0.0
    %529 = vmatpush1.msra.mxu0 %v161
    %530 = vmatprep.subr.mxu0 0.0
    %531 = vmatpush1.msra.mxu0 %v162
    %532 = vmatprep.subr.mxu0 0.0
    %533 = vmatpush1.msra.mxu0 %v163
    %534 = vmatprep.subr.mxu0 0.0
    %535 = vmatpush1.msra.mxu0 %v164
    %536 = vmatprep.subr.mxu0 0.0
    %537 = vmatpush1.msra.mxu0 %v165
    %538 = vmatprep.subr.mxu0 0.0
    %539 = vmatpush1.msra.mxu0 %v166
    %540 = vmatprep.subr.mxu0 0.0
    %541 = vmatpush1.msra.mxu0 %v167
    %542 = vmatprep.mubr.f32.mxu0 %v45
    %543 = vmatmul.mubr.f32.gmra.mrb[0].mxu0 %v44
    %v544 = vpop.f32.mrb[0].mxu0
    %v545 = vadd.f32 %v470, %v544
    %v546 = vpop.f32.mrb[0].mxu0
    %547 = vmatprep.mubr.f32.mxu0 %v61
    %548 = vmatmul.mubr.f32.gmra.mrb[0].mxu0 %v60
    %v549 = vpop.f32.mrb[0].mxu0
    %v550 = vadd.f32 %v475, %v549
    %v551 = vpop.f32.mrb[0].mxu0
    %552 = vdwg.mxu0
    %553 = vmatprep.subr.mxu0 0.0
    %554 = vmatpush1.msra.mxu0 %v168
    %555 = vmatprep.subr.mxu0 0.0
    %556 = vmatpush1.msra.mxu0 %v169
    %557 = vmatprep.subr.mxu0 0.0
    %558 = vmatpush1.msra.mxu0 %v170
    %559 = vmatprep.subr.mxu0 0.0
    %560 = vmatpush1.msra.mxu0 %v171
    %561 = vmatprep.subr.mxu0 0.0
    %562 = vmatpush1.msra.mxu0 %v172
    %563 = vmatprep.subr.mxu0 0.0
    %564 = vmatpush1.msra.mxu0 %v173
    %565 = vmatprep.subr.mxu0 0.0
    %566 = vmatpush1.msra.mxu0 %v174
    %567 = vmatprep.subr.mxu0 0.0
    %568 = vmatpush1.msra.mxu0 %v175
    %569 = vmatprep.subr.mxu0 0.0
    %570 = vmatpush1.msra.mxu0 %v176
    %571 = vmatprep.subr.mxu0 0.0
    %572 = vmatpush1.msra.mxu0 %v177
    %573 = vmatprep.subr.mxu0 0.0
    %574 = vmatpush1.msra.mxu0 %v178
    %575 = vmatprep.subr.mxu0 0.0
    %576 = vmatpush1.msra.mxu0 %v179
    %577 = vmatprep.subr.mxu0 0.0
    %578 = vmatpush1.msra.mxu0 %v180
    %579 = vmatprep.subr.mxu0 0.0
    %580 = vmatpush1.msra.mxu0 %v181
    %581 = vmatprep.subr.mxu0 0.0
    %582 = vmatpush1.msra.mxu0 %v182
    %583 = vmatprep.subr.mxu0 0.0
    %584 = vmatpush1.msra.mxu0 %v183
    %585 = vmatprep.subr.mxu0 0.0
    %586 = vmatpush1.msra.mxu0 %v184
    %587 = vmatprep.subr.mxu0 0.0
    %588 = vmatpush1.msra.mxu0 %v185
    %589 = vmatprep.subr.mxu0 0.0
    %590 = vmatpush1.msra.mxu0 %v186
    %591 = vmatprep.subr.mxu0 0.0
    %592 = vmatpush1.msra.mxu0 %v187
    %593 = vmatprep.subr.mxu0 0.0
    %594 = vmatpush1.msra.mxu0 %v188
    %595 = vmatprep.subr.mxu0 0.0
    %596 = vmatpush1.msra.mxu0 %v189
    %597 = vmatprep.subr.mxu0 0.0
    %598 = vmatpush1.msra.mxu0 %v190
    %599 = vmatprep.subr.mxu0 0.0
    %600 = vmatpush1.msra.mxu0 %v191
    %601 = vmatprep.subr.mxu0 0.0
    %602 = vmatpush1.msra.mxu0 %v192
    %603 = vmatprep.subr.mxu0 0.0
    %604 = vmatpush1.msra.mxu0 %v193
    %605 = vmatprep.subr.mxu0 0.0
    %606 = vmatpush1.msra.mxu0 %v194
    %607 = vmatprep.subr.mxu0 0.0
    %608 = vmatpush1.msra.mxu0 %v195
    %609 = vmatprep.subr.mxu0 0.0
    %610 = vmatpush1.msra.mxu0 %v196
    %611 = vmatprep.subr.mxu0 0.0
    %612 = vmatpush1.msra.mxu0 %v197
    %613 = vmatprep.subr.mxu0 0.0
    %614 = vmatpush1.msra.mxu0 %v198
    %615 = vmatprep.subr.mxu0 0.0
    %616 = vmatpush1.msra.mxu0 %v199
    %617 = vmatprep.mubr.f32.mxu0 %v47
    %618 = vmatmul.mubr.f32.gmra.mrb[0].mxu0 %v46
    %v619 = vpop.f32.mrb[0].mxu0
    %v620 = vadd.f32 %v545, %v619
    %v621 = vpop.f32.mrb[0].mxu0
    %622 = vmatprep.mubr.f32.mxu0 %v63
    %623 = vmatmul.mubr.f32.gmra.mrb[0].mxu0 %v62
    %v624 = vpop.f32.mrb[0].mxu0
    %v625 = vadd.f32 %v550, %v624
    %v626 = vpop.f32.mrb[0].mxu0
    %627 = vdwg.mxu0
    %628 = vmatprep.subr.mxu0 0.0
    %629 = vmatpush1.msra.mxu0 %v200
    %630 = vmatprep.subr.mxu0 0.0
    %631 = vmatpush1.msra.mxu0 %v201
    %632 = vmatprep.subr.mxu0 0.0
    %633 = vmatpush1.msra.mxu0 %v202
    %634 = vmatprep.subr.mxu0 0.0
    %635 = vmatpush1.msra.mxu0 %v203
    %636 = vmatprep.subr.mxu0 0.0
    %637 = vmatpush1.msra.mxu0 %v204
    %638 = vmatprep.subr.mxu0 0.0
    %639 = vmatpush1.msra.mxu0 %v205
    %640 = vmatprep.subr.mxu0 0.0
    %641 = vmatpush1.msra.mxu0 %v206
    %642 = vmatprep.subr.mxu0 0.0
    %643 = vmatpush1.msra.mxu0 %v207
    %644 = vmatprep.subr.mxu0 0.0
    %645 = vmatpush1.msra.mxu0 %v208
    %646 = vmatprep.subr.mxu0 0.0
    %647 = vmatpush1.msra.mxu0 %v209
    %648 = vmatprep.subr.mxu0 0.0
    %649 = vmatpush1.msra.mxu0 %v210
    %650 = vmatprep.subr.mxu0 0.0
    %651 = vmatpush1.msra.mxu0 %v211
    %652 = vmatprep.subr.mxu0 0.0
    %653 = vmatpush1.msra.mxu0 %v212
    %654 = vmatprep.subr.mxu0 0.0
    %655 = vmatpush1.msra.mxu0 %v213
    %656 = vmatprep.subr.mxu0 0.0
    %657 = vmatpush1.msra.mxu0 %v214
    %658 = vmatprep.subr.mxu0 0.0
    %659 = vmatpush1.msra.mxu0 %v215
    %660 = vmatprep.subr.mxu0 0.0
    %661 = vmatpush1.msra.mxu0 %v216
    %662 = vmatprep.subr.mxu0 0.0
    %663 = vmatpush1.msra.mxu0 %v217
    %664 = vmatprep.subr.mxu0 0.0
    %665 = vmatpush1.msra.mxu0 %v218
    %666 = vmatprep.subr.mxu0 0.0
    %667 = vmatpush1.msra.mxu0 %v219
    %668 = vmatprep.subr.mxu0 0.0
    %669 = vmatpush1.msra.mxu0 %v220
    %670 = vmatprep.subr.mxu0 0.0
    %671 = vmatpush1.msra.mxu0 %v221
    %672 = vmatprep.subr.mxu0 0.0
    %673 = vmatpush1.msra.mxu0 %v222
    %674 = vmatprep.subr.mxu0 0.0
    %675 = vmatpush1.msra.mxu0 %v223
    %676 = vmatprep.subr.mxu0 0.0
    %677 = vmatpush1.msra.mxu0 %v224
    %678 = vmatprep.subr.mxu0 0.0
    %679 = vmatpush1.msra.mxu0 %v225
    %680 = vmatprep.subr.mxu0 0.0
    %681 = vmatpush1.msra.mxu0 %v226
    %682 = vmatprep.subr.mxu0 0.0
    %683 = vmatpush1.msra.mxu0 %v227
    %684 = vmatprep.subr.mxu0 0.0
    %685 = vmatpush1.msra.mxu0 %v228
    %686 = vmatprep.subr.mxu0 0.0
    %687 = vmatpush1.msra.mxu0 %v229
    %688 = vmatprep.subr.mxu0 0.0
    %689 = vmatpush1.msra.mxu0 %v230
    %690 = vmatprep.subr.mxu0 0.0
    %691 = vmatpush1.msra.mxu0 %v231
    %692 = vmatprep.mubr.f32.mxu0 %v49
    %693 = vmatmul.mubr.f32.gmra.mrb[0].mxu0 %v48
    %v694 = vpop.f32.mrb[0].mxu0
    %v695 = vadd.f32 %v620, %v694
    %v696 = vpop.f32.mrb[0].mxu0
    %697 = vmatprep.mubr.f32.mxu0 %v65
    %698 = vmatmul.mubr.f32.gmra.mrb[0].mxu0 %v64
    %v699 = vpop.f32.mrb[0].mxu0
    %v700 = vadd.f32 %v625, %v699
    %v701 = vpop.f32.mrb[0].mxu0
    %702 = vdwg.mxu0
    %703 = vmatprep.subr.mxu0 0.0
    %704 = vmatpush1.msra.mxu0 %v232
    %705 = vmatprep.subr.mxu0 0.0
    %706 = vmatpush1.msra.mxu0 %v233
    %707 = vmatprep.subr.mxu0 0.0
    %708 = vmatpush1.msra.mxu0 %v234
    %709 = vmatprep.subr.mxu0 0.0
    %710 = vmatpush1.msra.mxu0 %v235
    %711 = vmatprep.subr.mxu0 0.0
    %712 = vmatpush1.msra.mxu0 %v236
    %713 = vmatprep.subr.mxu0 0.0
    %714 = vmatpush1.msra.mxu0 %v237
    %715 = vmatprep.subr.mxu0 0.0
    %716 = vmatpush1.msra.mxu0 %v238
    %717 = vmatprep.subr.mxu0 0.0
    %718 = vmatpush1.msra.mxu0 %v239
    %719 = vmatprep.subr.mxu0 0.0
    %720 = vmatpush1.msra.mxu0 %v240
    %721 = vmatprep.subr.mxu0 0.0
    %722 = vmatpush1.msra.mxu0 %v241
    %723 = vmatprep.subr.mxu0 0.0
    %724 = vmatpush1.msra.mxu0 %v242
    %725 = vmatprep.subr.mxu0 0.0
    %726 = vmatpush1.msra.mxu0 %v243
    %727 = vmatprep.subr.mxu0 0.0
    %728 = vmatpush1.msra.mxu0 %v244
    %729 = vmatprep.subr.mxu0 0.0
    %730 = vmatpush1.msra.mxu0 %v245
    %731 = vmatprep.subr.mxu0 0.0
    %732 = vmatpush1.msra.mxu0 %v246
    %733 = vmatprep.subr.mxu0 0.0
    %734 = vmatpush1.msra.mxu0 %v247
    %735 = vmatprep.subr.mxu0 0.0
    %736 = vmatpush1.msra.mxu0 %v248
    %737 = vmatprep.subr.mxu0 0.0
    %738 = vmatpush1.msra.mxu0 %v249
    %739 = vmatprep.subr.mxu0 0.0
    %740 = vmatpush1.msra.mxu0 %v250
    %741 = vmatprep.subr.mxu0 0.0
    %742 = vmatpush1.msra.mxu0 %v251
    %743 = vmatprep.subr.mxu0 0.0
    %744 = vmatpush1.msra.mxu0 %v252
    %745 = vmatprep.subr.mxu0 0.0
    %746 = vmatpush1.msra.mxu0 %v253
    %747 = vmatprep.subr.mxu0 0.0
    %748 = vmatpush1.msra.mxu0 %v254
    %749 = vmatprep.subr.mxu0 0.0
    %750 = vmatpush1.msra.mxu0 %v255
    %751 = vmatprep.subr.mxu0 0.0
    %752 = vmatpush1.msra.mxu0 %v256
    %753 = vmatprep.subr.mxu0 0.0
    %754 = vmatpush1.msra.mxu0 %v257
    %755 = vmatprep.subr.mxu0 0.0
    %756 = vmatpush1.msra.mxu0 %v258
    %757 = vmatprep.subr.mxu0 0.0
    %758 = vmatpush1.msra.mxu0 %v259
    %759 = vmatprep.subr.mxu0 0.0
    %760 = vmatpush1.msra.mxu0 %v260
    %761 = vmatprep.subr.mxu0 0.0
    %762 = vmatpush1.msra.mxu0 %v261
    %763 = vmatprep.subr.mxu0 0.0
    %764 = vmatpush1.msra.mxu0 %v262
    %765 = vmatprep.subr.mxu0 0.0
    %766 = vmatpush1.msra.mxu0 %v263
    %767 = vmatprep.mubr.f32.mxu0 %v51
    %768 = vmatmul.mubr.f32.gmra.mrb[0].mxu0 %v50
    %v769 = vpop.f32.mrb[0].mxu0
    %v770 = vadd.f32 %v695, %v769
    %v771 = vpop.f32.mrb[0].mxu0
    %772 = vmatprep.mubr.f32.mxu0 %v67
    %773 = vmatmul.mubr.f32.gmra.mrb[0].mxu0 %v66
    %v774 = vpop.f32.mrb[0].mxu0
    %v775 = vadd.f32 %v700, %v774
    %v776 = vpop.f32.mrb[0].mxu0
    %777 = vdwg.mxu0
    %778 = vmatprep.subr.mxu0 0.0
    %779 = vmatpush1.msra.mxu0 %v264
    %780 = vmatprep.subr.mxu0 0.0
    %781 = vmatpush1.msra.mxu0 %v265
    %782 = vmatprep.subr.mxu0 0.0
    %783 = vmatpush1.msra.mxu0 %v266
    %784 = vmatprep.subr.mxu0 0.0
    %785 = vmatpush1.msra.mxu0 %v267
    %786 = vmatprep.subr.mxu0 0.0
    %787 = vmatpush1.msra.mxu0 %v268
    %788 = vmatprep.subr.mxu0 0.0
    %789 = vmatpush1.msra.mxu0 %v269
    %790 = vmatprep.subr.mxu0 0.0
    %791 = vmatpush1.msra.mxu0 %v270
    %792 = vmatprep.subr.mxu0 0.0
    %793 = vmatpush1.msra.mxu0 %v271
    %794 = vmatprep.subr.mxu0 0.0
    %795 = vmatpush1.msra.mxu0 %v272
    %796 = vmatprep.subr.mxu0 0.0
    %797 = vmatpush1.msra.mxu0 %v273
    %798 = vmatprep.subr.mxu0 0.0
    %799 = vmatpush1.msra.mxu0 %v274
    %800 = vmatprep.subr.mxu0 0.0
    %801 = vmatpush1.msra.mxu0 %v275
    %802 = vmatprep.subr.mxu0 0.0
    %803 = vmatpush1.msra.mxu0 %v276
    %804 = vmatprep.subr.mxu0 0.0
    %805 = vmatpush1.msra.mxu0 %v277
    %806 = vmatprep.subr.mxu0 0.0
    %807 = vmatpush1.msra.mxu0 %v278
    %808 = vmatprep.subr.mxu0 0.0
    %809 = vmatpush1.msra.mxu0 %v279
    %810 = vmatprep.subr.mxu0 0.0
    %811 = vmatpush1.msra.mxu0 %v280
    %812 = vmatprep.subr.mxu0 0.0
    %813 = vmatpush1.msra.mxu0 %v281
    %814 = vmatprep.subr.mxu0 0.0
    %815 = vmatpush1.msra.mxu0 %v282
    %816 = vmatprep.subr.mxu0 0.0
    %817 = vmatpush1.msra.mxu0 %v283
    %818 = vmatprep.subr.mxu0 0.0
    %819 = vmatpush1.msra.mxu0 %v284
    %820 = vmatprep.subr.mxu0 0.0
    %821 = vmatpush1.msra.mxu0 %v285
    %822 = vmatprep.subr.mxu0 0.0
    %823 = vmatpush1.msra.mxu0 %v286
    %824 = vmatprep.subr.mxu0 0.0
    %825 = vmatpush1.msra.mxu0 %v287
    %826 = vmatprep.subr.mxu0 0.0
    %827 = vmatpush1.msra.mxu0 %v288
    %828 = vmatprep.subr.mxu0 0.0
    %829 = vmatpush1.msra.mxu0 %v289
    %830 = vmatprep.subr.mxu0 0.0
    %831 = vmatpush1.msra.mxu0 %v290
    %832 = vmatprep.subr.mxu0 0.0
    %833 = vmatpush1.msra.mxu0 %v291
    %834 = vmatprep.subr.mxu0 0.0
    %835 = vmatpush1.msra.mxu0 %v292
    %836 = vmatprep.subr.mxu0 0.0
    %837 = vmatpush1.msra.mxu0 %v293
    %838 = vmatprep.subr.mxu0 0.0
    %839 = vmatpush1.msra.mxu0 %v294
    %840 = vmatprep.subr.mxu0 0.0
    %841 = vmatpush1.msra.mxu0 %v295
    %842 = vmatprep.mubr.f32.mxu0 %v53
    %843 = vmatmul.mubr.f32.gmra.mrb[0].mxu0 %v52
    %v844 = vpop.f32.mrb[0].mxu0
    %v845 = vadd.f32 %v770, %v844
    %v846 = vpop.f32.mrb[0].mxu0
    %847 = vmatprep.mubr.f32.mxu0 %v69
    %848 = vmatmul.mubr.f32.gmra.mrb[0].mxu0 %v68
    %v849 = vpop.f32.mrb[0].mxu0
    %v850 = vadd.f32 %v775, %v849
    %v851 = vpop.f32.mrb[0].mxu0
    %852 = vdwg.mxu0
    %853 = vmatprep.subr.mxu0 0.0
    %854 = vmatpush1.msra.mxu0 %v296
    %855 = vmatprep.subr.mxu0 0.0
    %856 = vmatpush1.msra.mxu0 %v297
    %857 = vmatprep.subr.mxu0 0.0
    %858 = vmatpush1.msra.mxu0 %v298
    %859 = vmatprep.subr.mxu0 0.0
    %860 = vmatpush1.msra.mxu0 %v299
    %861 = vmatprep.subr.mxu0 0.0
    %862 = vmatpush1.msra.mxu0 %v300
    %863 = vmatprep.subr.mxu0 0.0
    %864 = vmatpush1.msra.mxu0 %v301
    %865 = vmatprep.subr.mxu0 0.0
    %866 = vmatpush1.msra.mxu0 %v302
    %867 = vmatprep.subr.mxu0 0.0
    %868 = vmatpush1.msra.mxu0 %v303
    %869 = vmatprep.subr.mxu0 0.0
    %870 = vmatpush1.msra.mxu0 %v304
    %871 = vmatprep.subr.mxu0 0.0
    %872 = vmatpush1.msra.mxu0 %v305
    %873 = vmatprep.subr.mxu0 0.0
    %874 = vmatpush1.msra.mxu0 %v306
    %875 = vmatprep.subr.mxu0 0.0
    %876 = vmatpush1.msra.mxu0 %v307
    %877 = vmatprep.subr.mxu0 0.0
    %878 = vmatpush1.msra.mxu0 %v308
    %879 = vmatprep.subr.mxu0 0.0
    %880 = vmatpush1.msra.mxu0 %v309
    %881 = vmatprep.subr.mxu0 0.0
    %882 = vmatpush1.msra.mxu0 %v310
    %883 = vmatprep.subr.mxu0 0.0
    %884 = vmatpush1.msra.mxu0 %v311
    %885 = vmatprep.subr.mxu0 0.0
    %886 = vmatpush1.msra.mxu0 %v312
    %887 = vmatprep.subr.mxu0 0.0
    %888 = vmatpush1.msra.mxu0 %v313
    %889 = vmatprep.subr.mxu0 0.0
    %890 = vmatpush1.msra.mxu0 %v314
    %891 = vmatprep.subr.mxu0 0.0
    %892 = vmatpush1.msra.mxu0 %v315
    %893 = vmatprep.subr.mxu0 0.0
    %894 = vmatpush1.msra.mxu0 %v316
    %895 = vmatprep.subr.mxu0 0.0
    %896 = vmatpush1.msra.mxu0 %v317
    %897 = vmatprep.subr.mxu0 0.0
    %898 = vmatpush1.msra.mxu0 %v318
    %899 = vmatprep.subr.mxu0 0.0
    %900 = vmatpush1.msra.mxu0 %v319
    %901 = vmatprep.subr.mxu0 0.0
    %902 = vmatpush1.msra.mxu0 %v320
    %903 = vmatprep.subr.mxu0 0.0
    %904 = vmatpush1.msra.mxu0 %v321
    %905 = vmatprep.subr.mxu0 0.0
    %906 = vmatpush1.msra.mxu0 %v322
    %907 = vmatprep.subr.mxu0 0.0
    %908 = vmatpush1.msra.mxu0 %v323
    %909 = vmatprep.subr.mxu0 0.0
    %910 = vmatpush1.msra.mxu0 %v324
    %911 = vmatprep.subr.mxu0 0.0
    %912 = vmatpush1.msra.mxu0 %v325
    %913 = vmatprep.subr.mxu0 0.0
    %914 = vmatpush1.msra.mxu0 %v326
    %915 = vmatprep.subr.mxu0 0.0
    %916 = vmatpush1.msra.mxu0 %v327
    %917 = vmatprep.mubr.f32.mxu0 %v55
    %918 = vmatmul.mubr.f32.gmra.mrb[0].mxu0 %v54
    %v919 = vpop.f32.mrb[0].mxu0
    %v920 = vadd.f32 %v845, %v919
    %v921 = vpop.f32.mrb[0].mxu0
    %922 = vmatprep.mubr.f32.mxu0 %v71
    %923 = vmatmul.mubr.f32.gmra.mrb[0].mxu0 %v70
    %v924 = vpop.f32.mrb[0].mxu0
    %v925 = vadd.f32 %v850, %v924
    %v926 = vpop.f32.mrb[0].mxu0
    %927 = vdwg.mxu0
    %928 = vst [vmem:[#allocation7] sm:$0xff] %v920
    %929 = vst [vmem:[#allocation7 + $0x8] sm:$0xff] %v925
    // Predicated region
    $region18: #{tpu_custom_call.1} parent=1 // pred_check
      _
    $region19: #{tpu_custom_call.1} parent=1 // pred_check_branch
      %931 = sbr.rel (0) target = $region21
    $region20: #{tpu_custom_call.1} parent=1 // pred_region
      %s933 = ssub.s32 256, 256
      %934 = vsyncadd [#allocation4], %s933
      %s935 = sshll.u32 [#allocation7], 4
      %s936 = int_to_ptr.vmem [resolvable:$true] %s935
      %941 = dma.vmem_to_hbm [thread:$0]  %s936, 256, %s2, [#allocation4], 128, 128, 8
    $region21: #{tpu_custom_call.1} parent=1 // pred_fallthru
      _
    // Predicated region
    $region22: #{tpu_custom_call.1} parent=1 // pred_check
      _
    $region23: #{tpu_custom_call.1} parent=1 // pred_check_branch
      %943 = sbr.rel (0) target = $region25
    $region24: #{tpu_custom_call.1} parent=1 // pred_region
      %944 = dma.done [#allocation4], 256
    $region25: #{tpu_custom_call.1} parent=1 // pred_fallthru
      _
    %945 = vsyncpa [#allocation3], 1
    %946 = vsyncpa [#allocation6], 1
    %947 = vsyncpa [#allocation4], 1

</llo_original>
